<compile_context>
chip_gen: v5e
topology: v5e:2x2
jax: 0.10.0
libtpu: 0.0.40
codegen_flags: <defaults>
</compile_context>

<pallas_src>
import jax
import jax.numpy as jnp
from jax.experimental import pallas as pl
from jax.experimental.pallas import tpu as pltpu


def _fbn_kernel(x_ref, scale_ref, shift_ref, o_ref):
    # x_ref: (TR, TL) tile; scale/shift: (TR, 1) per-row params (lane bcast).
    # f32 math regardless of input dtype for parity with the PyTorch forward.
    x = x_ref[...].astype(jnp.float32)
    o_ref[...] = (x * scale_ref[...] + shift_ref[...]).astype(o_ref.dtype)


def _vmem_cap_bytes():
    # ~75% of physical VMEM when discoverable; otherwise a value that is safe
    # on every generation (v7x has only 64 MiB physical per TensorCore).
    try:
        cap = int(pltpu.get_tpu_info().vmem_capacity_bytes)
        return max(16 << 20, (cap * 3) // 4)
    except Exception:  # pragma: no cover - conservative fallback
        return 48 << 20


def _pick_lane_block(S, budget_elems):
    """Largest lane block <= budget: full S, else a multiple of 128 that divides S."""
    if S <= budget_elems:
        return S
    m = (budget_elems // 128) * 128
    cand = m
    while cand >= 128:
        if S % cand == 0:
            return cand            # divides S -> no ragged last column tile
        cand -= 128
    return max(128, m)             # fallback: ragged last tile (rare)


def frozen_batch_norm_3d(x, weight, bias, running_mean, running_var, eps=1e-5,
                         target_tile_bytes=8 * 1024 * 1024):
    """FrozenBatchNorm3d forward. x: (N, C, D, H, W); returns same shape/dtype."""
    N, C, D, H, W = x.shape
    itemsize = jnp.dtype(x.dtype).itemsize

    # ---- zero-copy flatten split with a lane-dense last axis ---------------
    rep, S = 1, D * H * W
    for cand_rep, cand_lane in ((1, D * H * W), (D, H * W), (D * H, W)):
        if cand_lane % 128 == 0:
            rep, S = cand_rep, cand_lane
            break
    rows = N * C * rep
    x2 = x.reshape(rows, S)

    # ---- per-row scale/shift (tiny C-sized compute, done once) -------------
    scale_c = weight.astype(jnp.float32) * jax.lax.rsqrt(
        running_var.astype(jnp.float32) + jnp.float32(eps))
    shift_c = bias.astype(jnp.float32) - running_mean.astype(jnp.float32) * scale_c
    scale_r = jnp.tile(jnp.repeat(scale_c, rep), (N,)).reshape(rows, 1)
    shift_r = jnp.tile(jnp.repeat(shift_c, rep), (N,)).reshape(rows, 1)

    # ---- two-pass tile selection: lane block first, rows fill the budget ---
    # Sub-32-bit inputs: halve the budget to cover the in-kernel f32 temporary.
    eff_tile_bytes = target_tile_bytes // 2 if itemsize < 4 else target_tile_bytes
    elems_budget = max(8 * 128, eff_tile_bytes // itemsize)

    min_tr = min(rows, 8)
    tl = _pick_lane_block(S, max(128, elems_budget // max(1, min_tr)))
    rem_rows = max(min_tr, elems_budget // tl)
    if rem_rows >= rows:
        tr = rows
    else:
        tr = min(rows, max(8, (rem_rows // 8) * 8))

    # ---- guarantee >=2 blocks on a parallel axis (v7x has 2 TensorCores) ---
    if pl.cdiv(rows, tr) * pl.cdiv(S, tl) == 1:
        if rows >= 16:
            tr = min(rows, (((rows + 1) // 2 + 7) // 8) * 8)
        elif tl >= 256:
            cand = ((tl // 2) // 128) * 128
            while cand >= 128 and tl % cand != 0:
                cand -= 128
            if cand >= 128:
                tl = cand

    grid = (pl.cdiv(rows, tr), pl.cdiv(S, tl))

    # ---- explicit VMEM budget (double-buffered in + out + params + slack) --
    tr_pad = ((tr + 7) // 8) * 8
    live_bytes = (4 * tr * tl * itemsize                   # 2x in + 2x out bufs
                  + (tr * tl * 4 if itemsize < 4 else 0)   # f32 temp headroom
                  + 2 * 2 * tr_pad * 128 * 4)              # padded scale/shift
    vmem_limit = int(max(16 << 20,
                         min(_vmem_cap_bytes(), live_bytes + (8 << 20))))

    cost = pl.CostEstimate(
        flops=2 * rows * S,
        transcendentals=0,
        bytes_accessed=2 * rows * S * itemsize + 2 * rows * 4 * grid[1],
    )

    out2 = pl.pallas_call(
        _fbn_kernel,
        out_shape=jax.ShapeDtypeStruct((rows, S), x.dtype),
        grid_spec=pltpu.PrefetchScalarGridSpec(
            num_scalar_prefetch=0,
            grid=grid,
            in_specs=[
                pl.BlockSpec((tr, tl), lambda i, j: (i, j)),   # x tile
                # (i, 0) is constant across the inner j axis -> no re-DMA.
                pl.BlockSpec((tr, 1), lambda i, j: (i, 0)),    # per-row scale
                pl.BlockSpec((tr, 1), lambda i, j: (i, 0)),    # per-row shift
            ],
            out_specs=pl.BlockSpec((tr, tl), lambda i, j: (i, j)),
        ),
        compiler_params=pltpu.CompilerParams(
            dimension_semantics=("parallel", "parallel"),
            vmem_limit_bytes=vmem_limit),
        cost_estimate=cost,
    )(x2, scale_r, shift_r)

    # Zero-copy view back to NCDHW.
    return out2.reshape(N, C, D, H, W)


def _reference(x, weight, bias, running_mean, running_var, eps):
    scale = weight * jax.lax.rsqrt(running_var + eps)
    shift = bias - running_mean * scale
    C = weight.shape[0]
    return x * scale.reshape(1, C, 1, 1, 1) + shift.reshape(1, C, 1, 1, 1)


if __name__ == "__main__":
    key = jax.random.PRNGKey(0)
    kx, kw, kb, km, kv, kx2 = jax.random.split(key, 6)

    eps = 1e-5
    C = 4
    weight = jax.random.normal(kw, (C,), dtype=jnp.float32) + 1.0
    bias = jax.random.normal(kb, (C,), dtype=jnp.float32)
    running_mean = jax.random.normal(km, (C,), dtype=jnp.float32)
    running_var = jax.random.uniform(kv, (C,), dtype=jnp.float32,
                                     minval=0.5, maxval=2.0)

    # Case 1: lane-aligned spatial extent (D*H*W = 256, a multiple of 128).
    x = jax.random.normal(kx, (2, C, 4, 8, 8), dtype=jnp.float32)
    y = jax.block_until_ready(
        frozen_batch_norm_3d(x, weight, bias, running_mean, running_var, eps))
    y_ref = _reference(x, weight, bias, running_mean, running_var, eps)
    assert y.shape == x.shape and y.dtype == x.dtype
    assert jnp.allclose(y, y_ref, atol=1e-5, rtol=1e-5)

    # Case 2: non-128-aligned spatial extent (exercises the fallback split).
    x2 = jax.random.normal(kx2, (2, C, 4, 5, 5), dtype=jnp.float32)
    y2 = jax.block_until_ready(
        frozen_batch_norm_3d(x2, weight, bias, running_mean, running_var, eps))
    y2_ref = _reference(x2, weight, bias, running_mean, running_var, eps)
    assert y2.shape == x2.shape and y2.dtype == x2.dtype
    assert jnp.allclose(y2, y2_ref, atol=1e-5, rtol=1e-5)

    print("KERNEL_OK")
</pallas_src>

<mosaic_0001>
module attributes {stable_mosaic.version = 11 : i64} {
  func.func @_fbn_kernel(%arg0: i32, %arg1: i32, %arg2: memref<8x128xf32, #tpu.memory_space<vmem>>, %arg3: memref<8x1xf32, #tpu.memory_space<vmem>>, %arg4: memref<8x1xf32, #tpu.memory_space<vmem>>, %arg5: memref<8x128xf32, #tpu.memory_space<vmem>>) attributes {dimension_semantics = [#tpu.dimension_semantics<parallel>, #tpu.dimension_semantics<parallel>], iteration_bounds = array<i64: 1, 2>, scalar_prefetch = 0 : i64, scratch_operands = 0 : i64, tpu.core_type = #tpu.core_type<tc>, window_params = [{transform_indices = @transform_0, window_bounds = array<i64: 8, 128>}, {transform_indices = @transform_1, window_bounds = array<i64: 8, 1>}, {transform_indices = @transform_2, window_bounds = array<i64: 8, 1>}, {transform_indices = @transform_3, window_bounds = array<i64: 8, 128>}]} {
    %c0 = arith.constant 0 : index
    %c0_0 = arith.constant 0 : index
    %0 = vector.load %arg2[%c0, %c0_0] : memref<8x128xf32, #tpu.memory_space<vmem>>, vector<8x128xf32>
    %c0_1 = arith.constant 0 : index
    %c0_2 = arith.constant 0 : index
    %1 = vector.load %arg3[%c0_1, %c0_2] : memref<8x1xf32, #tpu.memory_space<vmem>>, vector<8x1xf32>
    %2 = vector.broadcast %1 : vector<8x1xf32> to vector<8x128xf32>
    %3 = arith.mulf %0, %2 : vector<8x128xf32>
    %c0_3 = arith.constant 0 : index
    %c0_4 = arith.constant 0 : index
    %4 = vector.load %arg4[%c0_3, %c0_4] : memref<8x1xf32, #tpu.memory_space<vmem>>, vector<8x1xf32>
    %5 = vector.broadcast %4 : vector<8x1xf32> to vector<8x128xf32>
    %6 = arith.addf %3, %5 : vector<8x128xf32>
    %c0_5 = arith.constant 0 : index
    %c0_6 = arith.constant 0 : index
    %7 = vector.load %arg5[%c0_5, %c0_6] : memref<8x128xf32, #tpu.memory_space<vmem>>, vector<8x128xf32>
    tpu.vector_store %arg5[%c0_5, %c0_6], %6 {strides = array<i32>} : memref<8x128xf32, #tpu.memory_space<vmem>>, vector<8x128xf32>,
    return
  }
  func.func @transform_0(%arg0: i32, %arg1: i32) -> (i32, i32) {
    %c0_i32 = arith.constant 0 : i32
    return %arg0, %arg1 : i32, i32
  }
  func.func @transform_1(%arg0: i32, %arg1: i32) -> (i32, i32) {
    %c0_i32 = arith.constant 0 : i32
    %c0_i32_0 = arith.constant 0 : i32
    return %arg0, %c0_i32 : i32, i32
  }
  func.func @transform_2(%arg0: i32, %arg1: i32) -> (i32, i32) {
    %c0_i32 = arith.constant 0 : i32
    %c0_i32_0 = arith.constant 0 : i32
    return %arg0, %c0_i32 : i32, i32
  }
  func.func @transform_3(%arg0: i32, %arg1: i32) -> (i32, i32) {
    %c0_i32 = arith.constant 0 : i32
    return %arg0, %arg1 : i32, i32
  }
}

</mosaic_0001>

<llo_original>
// kernel: tpu_custom_call.1
$region0: #{tpu_custom_call.1}
  #allocation0 [shape = 'u32[]', space=smem, size = 0x4, offset = 0x4, fixed_abs, tag = 'smem constant byte address 0x4 - core index']
  #allocation1 [shape = 'u32[72,128]{1,0:T(1,128)}', space=vmem, size = 0x9000, scoped, tag = 'internal scratch']
  %s0 = inlined_call_operand.vmem [shape: f32[8,256], index: 0, kind: input, shape index: {}]
  %s1 = inlined_call_operand.vmem [shape: f32[8,1], index: 1, kind: input, shape index: {}]
  %s2 = inlined_call_operand.vmem [shape: f32[8,1], index: 2, kind: input, shape index: {}]
  %s3 = inlined_call_operand.hbm [shape: f32[8,256], index: 3, kind: output, shape index: {}]
  %s4 = sld [smem:[#allocation0]]
  $region45: #{tpu_custom_call.1} parent=0
    _
  %s6 = ssub.s32 1, %s4
  %s7 = scalar_select 0, %s6, %s4
  $region1: #{tpu_custom_call.1} parent=0
    #allocation2 [shape = 'u8[8192]{0}', space=vmem, size = 0x2000, scoped, tag = 'output window, operand 0']
    #allocation3 [shape = 's32[2]{0}', space=sflag, size = 0x8, scoped, tag = 'scoped memory for tpu_custom_call.1']
    %8 = vsyncpa [#allocation3], 0
    %s9 = scalar_lea.sflag [#allocation3], 1
    %10 = vsyncpa %s9, 0
    loop: start=0, step=1, limit=4
    $region2: #{tpu_custom_call.1} parent=1 // loop_pre_header
      _
    $region3: #{tpu_custom_call.1} parent=1 // loop_header
      %s12 = sphi 0, %s16
      %p13 = scmp.ge.s32.totalorder %s12, 4
      %s19 = sphi 0, %s31
      %s20 = sphi 0, %s27
      %s21 = sphi 0, %s19
      %s22 = sphi 0, %s20
      %s23 = sphi 0, %s21
      %s24 = sphi 0, %s22
      %s36 = sphi 0, %s38
      %s39 = sphi 0, %s36
      %s40 = sphi 0, %s39
      %s56 = sphi 0, %s40
      %s62 = sphi 0, %s64
      %s65 = sphi 0, %s62
      %s66 = sphi 0, %s65
      %s82 = sphi 0, %s66
      %s88 = sphi 0, %s90
      %s91 = sphi 0, %s88
      %s92 = sphi 0, %s91
      %s108 = sphi 0, %s92
      %s116 = sphi 0, %s118
      %s119 = sphi 0, %s116
      %s120 = sphi 0, %s119
      %s136 = sphi 0, %s120
    $region4: #{tpu_custom_call.1} parent=1 // loop_header_branch
      %15 = sbr.rel (%p13) target = $region8
    $region5: #{tpu_custom_call.1} parent=1 // loop_body
      %s17 = ssub.s32 %s12, 1
      %s18 = ssub.s32 %s12, 2
      %s25 = sadd.s32 1, %s20
      %p26 = scmp.ge.s32.totalorder %s25, 2
      %s27 = scalar_select %p26, 0, %s25
      %s28 = sadd.s32 1, %s19
      %s29 = scalar_select %p26, %s28, %s19
      %p30 = scmp.ge.s32.totalorder %s29, 1
      %s31 = scalar_select %p30, 0, %s29
      %s32 = ssub.s32 %s19, %s31
      %s33 = ssub.s32 %s20, %s27
      %s34 = sor.u32 %s32, %s33
      %p35 = scmp.eq.s32.totalorder %s34, 0
      %s37 = sadd.s32 %s36, 1
      %s38 = scalar_select %p35, %s36, %s37
      %p41 = pneg %p35
      %p42 = scmp.eq.s32.totalorder %s12, 1
      %p43 = por %p41, %p42
      %p44 = scmp.ne.s32.totalorder %s36, %s39
      %p45 = scmp.eq.s32.totalorder %s12, 0
      %p46 = por %p44, %p45
      %p47 = scmp.ne.s32.totalorder %s36, %s39
      %p48 = scmp.eq.s32.totalorder %s17, 1
      %p49 = por %p47, %p48
      %p50 = scmp.ne.s32.totalorder %s39, %s40
      %p51 = scmp.eq.s32.totalorder %s17, 0
      %p52 = por %p50, %p51
      %p53 = scmp.ne.s32.totalorder %s39, %s40
      %p54 = scmp.eq.s32.totalorder %s18, 1
      %p55 = por %p53, %p54
      %p57 = scmp.ne.s32.totalorder %s40, %s56
      %p58 = scmp.eq.s32.totalorder %s18, 0
      %p59 = por %p57, %p58
      %s60 = ssub.s32 %s19, %s31
      %p61 = scmp.eq.s32.totalorder %s60, 0
      %s63 = sadd.s32 %s62, 1
      %s64 = scalar_select %p61, %s62, %s63
      %p67 = pneg %p61
      %p68 = scmp.eq.s32.totalorder %s12, 1
      %p69 = por %p67, %p68
      %p70 = scmp.ne.s32.totalorder %s62, %s65
      %p71 = scmp.eq.s32.totalorder %s12, 0
      %p72 = por %p70, %p71
      %p73 = scmp.ne.s32.totalorder %s62, %s65
      %p74 = scmp.eq.s32.totalorder %s17, 1
      %p75 = por %p73, %p74
      %p76 = scmp.ne.s32.totalorder %s65, %s66
      %p77 = scmp.eq.s32.totalorder %s17, 0
      %p78 = por %p76, %p77
      %p79 = scmp.ne.s32.totalorder %s65, %s66
      %p80 = scmp.eq.s32.totalorder %s18, 1
      %p81 = por %p79, %p80
      %p83 = scmp.ne.s32.totalorder %s66, %s82
      %p84 = scmp.eq.s32.totalorder %s18, 0
      %p85 = por %p83, %p84
      %s86 = ssub.s32 %s19, %s31
      %p87 = scmp.eq.s32.totalorder %s86, 0
      %s89 = sadd.s32 %s88, 1
      %s90 = scalar_select %p87, %s88, %s89
      %p93 = pneg %p87
      %p94 = scmp.eq.s32.totalorder %s12, 1
      %p95 = por %p93, %p94
      %p96 = scmp.ne.s32.totalorder %s88, %s91
      %p97 = scmp.eq.s32.totalorder %s12, 0
      %p98 = por %p96, %p97
      %p99 = scmp.ne.s32.totalorder %s88, %s91
      %p100 = scmp.eq.s32.totalorder %s17, 1
      %p101 = por %p99, %p100
      %p102 = scmp.ne.s32.totalorder %s91, %s92
      %p103 = scmp.eq.s32.totalorder %s17, 0
      %p104 = por %p102, %p103
      %p105 = scmp.ne.s32.totalorder %s91, %s92
      %p106 = scmp.eq.s32.totalorder %s18, 1
      %p107 = por %p105, %p106
      %p109 = scmp.ne.s32.totalorder %s92, %s108
      %p110 = scmp.eq.s32.totalorder %s18, 0
      %p111 = por %p109, %p110
      %s112 = ssub.s32 %s19, %s31
      %s113 = ssub.s32 %s20, %s27
      %s114 = sor.u32 %s112, %s113
      %p115 = scmp.eq.s32.totalorder %s114, 0
      %s117 = sadd.s32 %s116, 1
      %s118 = scalar_select %p115, %s116, %s117
      %p121 = pneg %p115
      %p122 = scmp.eq.s32.totalorder %s12, 1
      %p123 = por %p121, %p122
      %p124 = scmp.ne.s32.totalorder %s116, %s119
      %p125 = scmp.eq.s32.totalorder %s12, 0
      %p126 = por %p124, %p125
      %p127 = scmp.ne.s32.totalorder %s116, %s119
      %p128 = scmp.eq.s32.totalorder %s17, 1
      %p129 = por %p127, %p128
      %p130 = scmp.ne.s32.totalorder %s119, %s120
      %p131 = scmp.eq.s32.totalorder %s17, 0
      %p132 = por %p130, %p131
      %p133 = scmp.ne.s32.totalorder %s119, %s120
      %p134 = scmp.eq.s32.totalorder %s18, 1
      %p135 = por %p133, %p134
      %p137 = scmp.ne.s32.totalorder %s120, %s136
      %p138 = scmp.eq.s32.totalorder %s18, 0
      %p139 = por %p137, %p138
      %p140 = scmp.le.s32.totalorder 1, %s12
      %p141 = scmp.lt.s32.totalorder %s12, 3
      %p142 = pnand %p140, %p141
      %p143 = pneg %p142
      // Predicated region
      $region9: #{tpu_custom_call.1} parent=5 // pred_check
        _
      $region10: #{tpu_custom_call.1} parent=5 // pred_check_branch
        %145 = sbr.rel (%p142) target = $region12
      $region11: #{tpu_custom_call.1} parent=5 // pred_region
        %s146 = ssub.s32 %s12, 1
        // Predicated region
        $region13: #{tpu_custom_call.1} parent=11 // pred_check
          %p147 = pneg %p78
        $region14: #{tpu_custom_call.1} parent=11 // pred_check_branch
          %149 = sbr.rel (%p147) target = $region16
        $region15: #{tpu_custom_call.1} parent=11 // pred_region
          %p150 = scmp.lt.s32.totalorder %s21, 0
          %s151 = scalar_select %p150, %s21, 0
          %s152 = smul.addr %s151, 8
          %s153 = scalar_lea.vmem %s1, %s152
        $region16: #{tpu_custom_call.1} parent=11 // pred_fallthru
          _
        // Predicated region
        $region17: #{tpu_custom_call.1} parent=11 // pred_check
          %p154 = pneg %p104
        $region18: #{tpu_custom_call.1} parent=11 // pred_check_branch
          %156 = sbr.rel (%p154) target = $region20
        $region19: #{tpu_custom_call.1} parent=11 // pred_region
          %p157 = scmp.lt.s32.totalorder %s21, 0
          %s158 = scalar_select %p157, %s21, 0
          %s159 = smul.addr %s158, 8
          %s160 = scalar_lea.vmem %s2, %s159
        $region20: #{tpu_custom_call.1} parent=11 // pred_fallthru
          _
      $region12: #{tpu_custom_call.1} parent=5 // pred_fallthru
        _
      %p161 = scmp.lt.s32.totalorder %s12, 2
      // Predicated region
      $region21: #{tpu_custom_call.1} parent=5 // pred_check
        %p162 = pneg %p161
      $region22: #{tpu_custom_call.1} parent=5 // pred_check_branch
        %164 = sbr.rel (%p162) target = $region24
      $region23: #{tpu_custom_call.1} parent=5 // pred_region
        // Predicated region
        $region25: #{tpu_custom_call.1} parent=23 // pred_check
          %p165 = pneg %p46
        $region26: #{tpu_custom_call.1} parent=23 // pred_check_branch
          %167 = sbr.rel (%p165) target = $region28
        $region27: #{tpu_custom_call.1} parent=23 // pred_region
          %p168 = scmp.lt.s32.totalorder %s19, 0
          %s169 = scalar_select %p168, %s19, 0
          %p170 = scmp.lt.s32.totalorder %s20, 1
          %s171 = scalar_select %p170, %s20, 1
          %s172 = smul.addr %s169, 2
          %s173 = sadd.s32 %s171, %s172
          %s174 = smul.addr %s173, 8
          %s175 = scalar_lea.vmem %s0, %s174
        $region28: #{tpu_custom_call.1} parent=23 // pred_fallthru
          _
      $region24: #{tpu_custom_call.1} parent=5 // pred_fallthru
        _
      %p176 = scmp.le.s32.totalorder 1, %s12
      %p177 = scmp.lt.s32.totalorder %s12, 3
      %p178 = pnand %p176, %p177
      %p179 = pneg %p178
      // Predicated region
      $region29: #{tpu_custom_call.1} parent=5 // pred_check
        _
      $region30: #{tpu_custom_call.1} parent=5 // pred_check_branch
        %181 = sbr.rel (%p178) target = $region32
      $region31: #{tpu_custom_call.1} parent=5 // pred_region
        %s182 = ssub.s32 %s12, 1
        %p183 = scmp.lt.s32.totalorder %s21, 0
        %s184 = scalar_select %p183, %s21, 0
        %p185 = scmp.lt.s32.totalorder %s22, 1
        %s186 = scalar_select %p185, %s22, 1
        %s187 = smul.addr %s184, 2
        %s188 = sadd.s32 %s186, %s187
        %s189 = smul.addr %s188, 8
        %s190 = scalar_lea.vmem %s0, %s189
        %p191 = pneg %p52
        %p192 = pneg %p49
        %p193 = scmp.lt.s32.totalorder %s21, 0
        %s194 = scalar_select %p193, %s21, 0
        %s195 = smul.addr %s194, 8
        %s196 = scalar_lea.vmem %s1, %s195
        %p197 = pneg %p78
        %p198 = pneg %p75
        %p199 = scmp.lt.s32.totalorder %s21, 0
        %s200 = scalar_select %p199, %s21, 0
        %s201 = smul.addr %s200, 8
        %s202 = scalar_lea.vmem %s2, %s201
        %p203 = pneg %p104
        %p204 = pneg %p101
        %p205 = pneg %p132
        %p206 = pneg %p129
        %s207 = sand.u32 %s119, 1
        %s208 = scalar_lea.sflag [#allocation3], %s207
        %s209 = sand.u32 %s119, 1
        %s210 = smul.addr %s209, 8
        %s211 = scalar_lea.vmem [#allocation2], %s210
        %p212 = scmp.lt.s32.totalorder %s21, 0
        %s213 = scalar_select %p212, %s21, 0
        %p214 = scmp.lt.s32.totalorder %s22, 1
        %s215 = scalar_select %p214, %s22, 1
        %s216 = smul.addr %s213, 2
        %s217 = sadd.s32 %s215, %s216
        %s218 = smul.addr %s217, 8
        %s219 = scalar_lea.vmem %s0, %s218
        %p220 = scmp.lt.s32.totalorder %s21, 0
        %s221 = scalar_select %p220, %s21, 0
        %s222 = smul.addr %s221, 8
        %s223 = scalar_lea.vmem %s1, %s222
        %p224 = scmp.lt.s32.totalorder %s21, 0
        %s225 = scalar_select %p224, %s21, 0
        %s226 = smul.addr %s225, 8
        %s227 = scalar_lea.vmem %s2, %s226
        %v228 = vld [vmem:[%s219] sm:$0xff]
        %v229 = vld [vmem:[%s223] sm:$0xff]
        %231 = vset.pattern.permute.xlu0 0
        %232 = vperm.xlu0 %231, %v229
        %v233 = vpop.permute.xlu0 %232
        %v235 = vmul.f32 %v228, %v233
        %v236 = vld [vmem:[%s227] sm:$0xff]
        %238 = vset.pattern.permute.xlu0 0
        %239 = vperm.xlu0 %238, %v236
        %v240 = vpop.permute.xlu0 %239
        %v242 = vadd.f32 %v235, %v240
        %243 = vst [vmem:[%s211] sm:$0xff] %v242
        %s244 = sand.u32 %s119, 1
        %s245 = scalar_lea.sflag [#allocation3], %s244
        %s246 = sand.u32 %s119, 1
        %s247 = smul.addr %s246, 8
        %s248 = scalar_lea.vmem [#allocation2], %s247
        // Predicated region
        $region33: #{tpu_custom_call.1} parent=31 // pred_check
          %p249 = pneg %p129
        $region34: #{tpu_custom_call.1} parent=31 // pred_check_branch
          %251 = sbr.rel (%p249) target = $region36
        $region35: #{tpu_custom_call.1} parent=31 // pred_region
          %253 = vsyncadd %s245, 0
          %s254 = smul.addr %s21, 2
          %s255 = sadd.s32 %s22, %s254
          %s256 = smul.addr %s255, 8
          %s257 = scalar_lea.hbm %s3, %s256
          %s259 = sshll.u32 %s248, 4
          %s260 = int_to_ptr.vmem [resolvable:$true] %s259
          %s261 = sshll.u32 %s257, 4
          %s262 = int_to_ptr.hbm [resolvable:$true] %s261
          %264 = dma.vmem_to_hbm [thread:$0]  %s260, 128, %s262, %s245
        $region36: #{tpu_custom_call.1} parent=31 // pred_fallthru
          _
      $region32: #{tpu_custom_call.1} parent=5 // pred_fallthru
        _
      %p265 = scmp.le.s32.totalorder 2, %s12
      // Predicated region
      $region37: #{tpu_custom_call.1} parent=5 // pred_check
        %p266 = pneg %p265
      $region38: #{tpu_custom_call.1} parent=5 // pred_check_branch
        %268 = sbr.rel (%p266) target = $region40
      $region39: #{tpu_custom_call.1} parent=5 // pred_region
        %s269 = ssub.s32 %s12, 2
        // Predicated region
        $region41: #{tpu_custom_call.1} parent=39 // pred_check
          %p270 = pneg %p135
        $region42: #{tpu_custom_call.1} parent=39 // pred_check_branch
          %272 = sbr.rel (%p270) target = $region44
        $region43: #{tpu_custom_call.1} parent=39 // pred_region
          %s273 = sand.u32 %s120, 1
          %s274 = scalar_lea.sflag [#allocation3], %s273
          %s275 = sand.u32 %s120, 1
          %s276 = smul.addr %s275, 8
          %s277 = scalar_lea.vmem [#allocation2], %s276
          %279 = dma.done %s274, 128
        $region44: #{tpu_custom_call.1} parent=39 // pred_fallthru
          _
      $region40: #{tpu_custom_call.1} parent=5 // pred_fallthru
        _
    $region6: #{tpu_custom_call.1} parent=1 // loop_footer
      %s16 = sadd.s32 1, %s12
    $region7: #{tpu_custom_call.1} parent=1 // loop_footer_branch
      %11 = sbr.rel target = $region3
    $region8: #{tpu_custom_call.1} parent=1 // loop_exit
      _
    %280 = vsyncpa [#allocation3], 1
    %s281 = scalar_lea.sflag [#allocation3], 1
    %282 = vsyncpa %s281, 1

</llo_original>
